<compile_context>
chip_gen: v7x
topology: tpu7x:2x2x1
jax: 0.10.0
libtpu: 0.0.40
codegen_flags: <defaults>
</compile_context>

<pallas_src>
import numpy as np

import jax
import jax.numpy as jnp
from jax.experimental import pallas as pl
from jax.experimental.pallas import tpu as pltpu


# ----------------------------------------------------------------------------
# Kernel
# ----------------------------------------------------------------------------
def se_block_kernel(x_ref, pool_ref, expand_ref, w1t_ref, w2t_ref, o_ref):
    # x_ref     : (TB, C*L)  input dtype (f32 or bf16) -- lane-dense block
    # pool_ref  : (C*L, C)   compute dtype, (1/L) one-hot "mean over L" matrix
    # expand_ref: (C, C*L)   compute dtype, one-hot "repeat gate L times"
    # w1t_ref   : (C, H)     f32  (= torch fc[0].weight.T)
    # w2t_ref   : (H, C)     f32  (= torch fc[2].weight.T)
    # o_ref     : (TB, C*L)  input dtype
    cdt = pool_ref.dtype                     # compute dtype for the big tensors
    x = x_ref[...].astype(cdt)               # no-op on the bf16-native path

    # Squeeze: per-channel mean over L as one MXU matmul (1/L folded into pool),
    # always accumulated in f32.
    y = jnp.dot(x, pool_ref[...], preferred_element_type=jnp.float32)        # (TB, C)

    # Excitation: Linear -> ReLU -> Linear -> Sigmoid, gate math kept in f32.
    h = jnp.maximum(
        jnp.dot(y, w1t_ref[...], preferred_element_type=jnp.float32), 0.0)   # (TB, H)
    s = jax.nn.sigmoid(
        jnp.dot(h, w2t_ref[...], preferred_element_type=jnp.float32))        # (TB, C)

    # Expand the per-channel gate to the lane-dense (TB, C*L) layout via the
    # one-hot matmul (no cross-lane reshape of the big tensor).  The one-hot
    # structure makes the bf16 matmul exact relative to the bf16 output.
    gate = jnp.dot(s.astype(cdt), expand_ref[...])                           # (TB, C*L)

    # Scale and cast in a single expression: no extra VMEM materializations
    # (important on v5e's single vector-store slot).
    o_ref[...] = (x * gate).astype(o_ref.dtype)


# ----------------------------------------------------------------------------
# Generation-aware configuration helpers
# ----------------------------------------------------------------------------
def _chip_kind():
    try:
        return jax.devices()[0].device_kind.lower()
    except Exception:
        return ""


def _vmem_config(kind):
    """Returns (vmem_limit_bytes, block_vmem_budget_bytes, min_grid_steps)."""
    try:
        phys = int(pltpu.get_tpu_info().vmem_capacity_bytes)
    except Exception:
        # Conservative fallback: 128 MiB on known v5e/v6e, else v7x-sized 64 MiB.
        phys = 128 * 1024 * 1024 if ("v5" in kind or "v6" in kind) else 64 * 1024 * 1024
    # Scoped limit: half of physical VMEM, capped at 64 MiB.
    #   v7x  (64 MiB physical)  -> 32 MiB limit, 16 MiB block budget
    #   v5e/v6e (128 MiB)       -> 64 MiB limit, 32 MiB block budget
    vmem_limit = max(min(phys // 2, 64 * 1024 * 1024), 16 * 1024 * 1024)
    block_budget = vmem_limit // 2
    # v7x has 2 TensorCores per chip: make sure the "parallel" grid axis has
    # at least 2 (balanced) steps so neither core sits idle.
    min_grid_steps = 2 if "v7" in kind else 1
    return vmem_limit, block_budget, min_grid_steps


def _pick_block_b(B, CL, x_itemsize, cdt_itemsize, const_bytes, block_budget_bytes,
                  min_grid_steps):
    # Per-row VMEM residency:
    #   x block + out block, each double-buffered by the pipeline: 4 * CL * x_item
    #   in-kernel temporaries (x in compute dtype, gate, scaled product):
    #                                                            ~3 * CL * cdt_item
    per_row = 4 * CL * x_itemsize + 3 * CL * cdt_itemsize
    avail = block_budget_bytes - const_bytes
    cap = max(8, int(avail // per_row)) if avail > per_row * 8 else 8
    cap = max(8, (cap // 8) * 8)
    tb = min(B, 512, cap)                     # target ~512-row blocks (>= 1-2 MiB/step)
    if tb < B:
        tb = max(8, (tb // 8) * 8)
    # v7x: keep the grid at >= min_grid_steps (even) steps for both TensorCores.
    if min_grid_steps >= 2 and B >= 16:
        nb = -(-B // tb)
        if nb < min_grid_steps or nb % 2:
            target_nb = max(min_grid_steps, nb + (nb % 2))
            tb = -(-B // target_nb)
            tb = max(8, -(-tb // 8) * 8)      # round UP to a multiple of 8
            tb = min(tb, B)
    return tb


# Probe (once) whether single-buffered loop-invariant operands are supported.
_BUFFERED_CONST_OK = None


def _probe_copy_kernel(x_ref, o_ref):
    o_ref[...] = x_ref[...]


def _buffered_const_supported():
    global _BUFFERED_CONST_OK
    if _BUFFERED_CONST_OK is None:
        try:
            spec = pl.BlockSpec((8, 128), lambda i: (0, 0),
                                pipeline_mode=pl.Buffered(buffer_count=1))
            out = pl.pallas_call(
                _probe_copy_kernel,
                out_shape=jax.ShapeDtypeStruct((8, 128), jnp.float32),
                grid=(1,),
                in_specs=[spec],
                out_specs=pl.BlockSpec((8, 128), lambda i: (0, 0)),
            )(jnp.zeros((8, 128), jnp.float32))
            jax.block_until_ready(out)
            _BUFFERED_CONST_OK = True
        except Exception:
            _BUFFERED_CONST_OK = False
    return _BUFFERED_CONST_OK


# Cache the tiny one-hot pool/expand matrices so repeated (eager) calls don't
# rebuild / re-upload them.  (Under jit they constant-fold anyway.)
_CONST_CACHE = {}


def _pool_expand(C, L, dtype):
    key = (C, L, jnp.dtype(dtype).name)
    if key not in _CONST_CACHE:
        eye = np.eye(C, dtype=np.float32)
        pool = np.repeat(eye, L, axis=0) / float(L)     # (C*L, C): mean over L
        expand = np.repeat(eye, L, axis=1)              # (C, C*L): repeat gate L times
        _CONST_CACHE[key] = (jnp.asarray(pool, dtype=dtype),
                             jnp.asarray(expand, dtype=dtype))
    return _CONST_CACHE[key]


# ----------------------------------------------------------------------------
# Wrapper
# ----------------------------------------------------------------------------
def se_block(x, w1, w2, *, block_b=None):
    """x: (B, C, L); w1: (H, C) = fc[0].weight; w2: (C, H) = fc[2].weight."""
    B, C, L = x.shape
    H = w1.shape[0]
    assert w1.shape == (H, C) and w2.shape == (C, H)

    CL = C * L
    # Lane-dense path needs the flattened last dim to be a multiple of 128.
    # TODO(synk): pad L (or fall back to a (TB, C, L) block) when C*L % 128 != 0.
    assert CL % 128 == 0, "se_block: C*L must be a multiple of 128"

    kind = _chip_kind()
    vmem_limit, block_budget, min_grid_steps = _vmem_config(kind)

    # bf16-native big-tensor path only for bf16 inputs on chips with a bf16 VPU
    # (v6e/v7x); f32 inputs keep full-precision math, v5e keeps the f32 scale.
    lowp = (x.dtype == jnp.bfloat16) and (("v6" in kind) or ("v7" in kind))
    cdt = jnp.bfloat16 if lowp else jnp.float32

    x_flat = x.reshape(B, CL)                       # contiguous collapse: free relayout
    pool, expand = _pool_expand(C, L, cdt)
    w1t = w1.T.astype(jnp.float32)                  # (C, H) pre-transposed in wrapper
    w2t = w2.T.astype(jnp.float32)                  # (H, C)

    use_buffered_consts = _buffered_const_supported()
    const_buf_count = 1 if use_buffered_consts else 2
    const_bytes = const_buf_count * (
        pool.size * pool.dtype.itemsize + expand.size * expand.dtype.itemsize
        + w1t.size * 4 + w2t.size * 4)

    if block_b is None:
        block_b = _pick_block_b(B, CL, jnp.dtype(x.dtype).itemsize,
                                jnp.dtype(cdt).itemsize, const_bytes,
                                block_budget, min_grid_steps)
    nb = pl.cdiv(B, block_b)

    const_mode = ({"pipeline_mode": pl.Buffered(buffer_count=1)}
                  if use_buffered_consts else {})

    def const_spec(shape):
        return pl.BlockSpec(shape, lambda b: (0, 0), **const_mode)

    out_flat = pl.pallas_call(
        se_block_kernel,
        out_shape=jax.ShapeDtypeStruct((B, CL), x.dtype),
        grid_spec=pltpu.PrefetchScalarGridSpec(
            num_scalar_prefetch=0,
            grid=(nb,),
            in_specs=[
                pl.BlockSpec((block_b, CL), lambda b: (b, 0)),   # x block (pipelined)
                const_spec(pool.shape),                          # loop-invariant
                const_spec(expand.shape),                        # constants / weights
                const_spec(w1t.shape),
                const_spec(w2t.shape),
            ],
            out_specs=pl.BlockSpec((block_b, CL), lambda b: (b, 0)),
        ),
        compiler_params=pltpu.CompilerParams(
            dimension_semantics=("parallel",),      # shard batch blocks across TCs
            vmem_limit_bytes=vmem_limit,            # generation-aware scoped limit
        ),
    )(x_flat, pool, expand, w1t, w2t)

    return out_flat.reshape(B, C, L)


def se_block_ref(x, w1, w2):
    # Pure-JAX reference for correctness checking (f32 math).
    xf = x.astype(jnp.float32)
    y = jnp.mean(xf, axis=-1)
    h = jnp.maximum(y @ w1.T, 0.0)
    s = jax.nn.sigmoid(h @ w2.T)
    return (xf * s[:, :, None]).astype(x.dtype)


if __name__ == "__main__":
    # Shapes consistent with the model's SE blocks (channels=64, reduction=16,
    # short sequence after striding).
    B, C, L = 16, 64, 16
    reduction = 16
    H = C // reduction  # 4

    key = jax.random.PRNGKey(0)
    kx, k1, k2 = jax.random.split(key, 3)

    x = jax.random.normal(kx, (B, C, L), dtype=jnp.float32)
    # torch Linear weight layouts: fc[0]: (H, C), fc[2]: (C, H), both bias-free.
    w1 = jax.random.normal(k1, (H, C), dtype=jnp.float32) * 0.1
    w2 = jax.random.normal(k2, (C, H), dtype=jnp.float32) * 0.1

    # f32 path, auto (generation-aware) block sizing.
    out = jax.block_until_ready(se_block(x, w1, w2))
    ref = se_block_ref(x, w1, w2)
    assert out.shape == (B, C, L)
    assert jnp.allclose(out, ref, atol=1e-5, rtol=1e-5), "f32 mismatch vs reference"

    # bf16 I/O path (bf16-native big-tensor math on v6e/v7x, f32 math on v5e).
    xb = x.astype(jnp.bfloat16)
    outb = jax.block_until_ready(se_block(xb, w1, w2))
    refb = se_block_ref(xb, w1, w2)
    assert outb.dtype == jnp.bfloat16
    assert jnp.allclose(outb.astype(jnp.float32), refb.astype(jnp.float32),
                        atol=3e-2, rtol=3e-2), "bf16 mismatch vs reference"

    # Correctness-only check of the multi-step grid + ragged edge block (rows
    # are independent, so the padded edge rows never contaminate valid output).
    # Not a performance configuration.
    B2 = 40
    x2 = jax.random.normal(jax.random.PRNGKey(0), (B2, C, L), dtype=jnp.float32)
    out2 = jax.block_until_ready(se_block(x2, w1, w2, block_b=16))
    ref2 = se_block_ref(x2, w1, w2)
    assert jnp.allclose(out2, ref2, atol=1e-5, rtol=1e-5), "edge-block mismatch"

    print("KERNEL_OK")
</pallas_src>

<mosaic_0001>
module attributes {stable_mosaic.version = 11 : i64} {
  func.func @_probe_copy_kernel(%arg0: i32, %arg1: memref<8x128xf32, #tpu.memory_space<vmem>>, %arg2: memref<8x128xf32, #tpu.memory_space<vmem>>) attributes {dimension_semantics = [#tpu.dimension_semantics<arbitrary>], iteration_bounds = array<i64: 1>, scalar_prefetch = 0 : i64, scratch_operands = 0 : i64, tpu.core_type = #tpu.core_type<tc>, window_params = [{pipeline_mode = #tpu.pipeline_mode<synchronous>, transform_indices = @transform_0, window_bounds = array<i64: 8, 128>}, {pipeline_mode = #tpu.pipeline_mode<synchronous>, transform_indices = @transform_1, window_bounds = array<i64: 8, 128>}]} {
    %c0 = arith.constant 0 : index
    %c0_0 = arith.constant 0 : index
    %0 = vector.load %arg1[%c0, %c0_0] : memref<8x128xf32, #tpu.memory_space<vmem>>, vector<8x128xf32>
    %c0_1 = arith.constant 0 : index
    %c0_2 = arith.constant 0 : index
    %1 = vector.load %arg2[%c0_1, %c0_2] : memref<8x128xf32, #tpu.memory_space<vmem>>, vector<8x128xf32>
    tpu.vector_store %arg2[%c0_1, %c0_2], %0 {strides = array<i32>} : memref<8x128xf32, #tpu.memory_space<vmem>>, vector<8x128xf32>,
    return
  }
  func.func @transform_0(%arg0: i32) -> (i32, i32) {
    %c0_i32 = arith.constant 0 : i32
    %c0_i32_0 = arith.constant 0 : i32
    %c0_i32_1 = arith.constant 0 : i32
    return %c0_i32, %c0_i32_0 : i32, i32
  }
  func.func @transform_1(%arg0: i32) -> (i32, i32) {
    %c0_i32 = arith.constant 0 : i32
    %c0_i32_0 = arith.constant 0 : i32
    %c0_i32_1 = arith.constant 0 : i32
    return %c0_i32, %c0_i32_0 : i32, i32
  }
}

module attributes {stable_mosaic.version = 11 : i64} {
  func.func @se_block_kernel(%arg0: i32, %arg1: memref<16x1024xf32, #tpu.memory_space<vmem>>, %arg2: memref<1024x64xf32, #tpu.memory_space<vmem>>, %arg3: memref<64x1024xf32, #tpu.memory_space<vmem>>, %arg4: memref<64x4xf32, #tpu.memory_space<vmem>>, %arg5: memref<4x64xf32, #tpu.memory_space<vmem>>, %arg6: memref<16x1024xf32, #tpu.memory_space<vmem>>) attributes {dimension_semantics = [#tpu.dimension_semantics<parallel>], iteration_bounds = array<i64: 1>, scalar_prefetch = 0 : i64, scratch_operands = 0 : i64, tpu.core_type = #tpu.core_type<tc>, window_params = [{transform_indices = @transform_0, window_bounds = array<i64: 16, 1024>}, {pipeline_mode = #tpu.pipeline_mode<synchronous>, transform_indices = @transform_1, window_bounds = array<i64: 1024, 64>}, {pipeline_mode = #tpu.pipeline_mode<synchronous>, transform_indices = @transform_2, window_bounds = array<i64: 64, 1024>}, {pipeline_mode = #tpu.pipeline_mode<synchronous>, transform_indices = @transform_3, window_bounds = array<i64: 64, 4>}, {pipeline_mode = #tpu.pipeline_mode<synchronous>, transform_indices = @transform_4, window_bounds = array<i64: 4, 64>}, {transform_indices = @transform_5, window_bounds = array<i64: 16, 1024>}]} {
    %c0 = arith.constant 0 : index
    %c0_0 = arith.constant 0 : index
    %0 = vector.load %arg1[%c0, %c0_0] : memref<16x1024xf32, #tpu.memory_space<vmem>>, vector<16x1024xf32>
    %c0_1 = arith.constant 0 : index
    %c0_2 = arith.constant 0 : index
    %1 = vector.load %arg2[%c0_1, %c0_2] : memref<1024x64xf32, #tpu.memory_space<vmem>>, vector<1024x64xf32>
    %cst = arith.constant dense<0.000000e+00> : vector<16x64xf32>
    %2 = tpu.matmul %0, %1, %cst {dimension_numbers = #tpu.dot_dimension_numbers<[1], [0], [0], [1], [0, 0, 1, 1], [], []>} : vector<16x1024xf32>, vector<1024x64xf32>, vector<16x64xf32> -> vector<16x64xf32>
    %c0_3 = arith.constant 0 : index
    %c0_4 = arith.constant 0 : index
    %3 = vector.load %arg4[%c0_3, %c0_4] : memref<64x4xf32, #tpu.memory_space<vmem>>, vector<64x4xf32>
    %cst_5 = arith.constant dense<0.000000e+00> : vector<16x4xf32>
    %4 = tpu.matmul %2, %3, %cst_5 {dimension_numbers = #tpu.dot_dimension_numbers<[1], [0], [0], [1], [0, 0, 1, 1], [], []>} : vector<16x64xf32>, vector<64x4xf32>, vector<16x4xf32> -> vector<16x4xf32>
    %cst_6 = arith.constant 0.000000e+00 : f32
    %5 = vector.broadcast %cst_6 : f32 to vector<16x4xf32>
    %6 = arith.maximumf %4, %5 : vector<16x4xf32>
    %c0_7 = arith.constant 0 : index
    %c0_8 = arith.constant 0 : index
    %7 = vector.load %arg5[%c0_7, %c0_8] : memref<4x64xf32, #tpu.memory_space<vmem>>, vector<4x64xf32>
    %cst_9 = arith.constant dense<0.000000e+00> : vector<16x64xf32>
    %8 = tpu.matmul %6, %7, %cst_9 {dimension_numbers = #tpu.dot_dimension_numbers<[1], [0], [0], [1], [0, 0, 1, 1], [], []>} : vector<16x4xf32>, vector<4x64xf32>, vector<16x64xf32> -> vector<16x64xf32>
    %9 = arith.negf %8 : vector<16x64xf32>
    %10 = math.exp %9 : vector<16x64xf32>
    %cst_10 = arith.constant 1.000000e+00 : f32
    %11 = vector.broadcast %cst_10 : f32 to vector<16x64xf32>
    %12 = arith.addf %11, %10 : vector<16x64xf32>
    %13 = arith.divf %11, %12 : vector<16x64xf32>
    %c0_11 = arith.constant 0 : index
    %c0_12 = arith.constant 0 : index
    %14 = vector.load %arg3[%c0_11, %c0_12] : memref<64x1024xf32, #tpu.memory_space<vmem>>, vector<64x1024xf32>
    %cst_13 = arith.constant dense<0.000000e+00> : vector<16x1024xf32>
    %15 = tpu.matmul %13, %14, %cst_13 {dimension_numbers = #tpu.dot_dimension_numbers<[1], [0], [0], [1], [0, 0, 1, 1], [], []>} : vector<16x64xf32>, vector<64x1024xf32>, vector<16x1024xf32> -> vector<16x1024xf32>
    %16 = arith.mulf %0, %15 : vector<16x1024xf32>
    %c0_14 = arith.constant 0 : index
    %c0_15 = arith.constant 0 : index
    %17 = vector.load %arg6[%c0_14, %c0_15] : memref<16x1024xf32, #tpu.memory_space<vmem>>, vector<16x1024xf32>
    tpu.vector_store %arg6[%c0_14, %c0_15], %16 {strides = array<i32>} : memref<16x1024xf32, #tpu.memory_space<vmem>>, vector<16x1024xf32>,
    return
  }
  func.func @transform_0(%arg0: i32) -> (i32, i32) {
    %c0_i32 = arith.constant 0 : i32
    %c0_i32_0 = arith.constant 0 : i32
    return %arg0, %c0_i32 : i32, i32
  }
  func.func @transform_1(%arg0: i32) -> (i32, i32) {
    %c0_i32 = arith.constant 0 : i32
    %c0_i32_0 = arith.constant 0 : i32
    %c0_i32_1 = arith.constant 0 : i32
    return %c0_i32, %c0_i32_0 : i32, i32
  }
  func.func @transform_2(%arg0: i32) -> (i32, i32) {
    %c0_i32 = arith.constant 0 : i32
    %c0_i32_0 = arith.constant 0 : i32
    %c0_i32_1 = arith.constant 0 : i32
    return %c0_i32, %c0_i32_0 : i32, i32
  }
  func.func @transform_3(%arg0: i32) -> (i32, i32) {
    %c0_i32 = arith.constant 0 : i32
    %c0_i32_0 = arith.constant 0 : i32
    %c0_i32_1 = arith.constant 0 : i32
    return %c0_i32, %c0_i32_0 : i32, i32
  }
  func.func @transform_4(%arg0: i32) -> (i32, i32) {
    %c0_i32 = arith.constant 0 : i32
    %c0_i32_0 = arith.constant 0 : i32
    %c0_i32_1 = arith.constant 0 : i32
    return %c0_i32, %c0_i32_0 : i32, i32
  }
  func.func @transform_5(%arg0: i32) -> (i32, i32) {
    %c0_i32 = arith.constant 0 : i32
    %c0_i32_0 = arith.constant 0 : i32
    return %arg0, %c0_i32 : i32, i32
  }
}

</mosaic_0001>

<llo_original>
// kernel: tpu_custom_call.1
$region0: #{tpu_custom_call.1}
  #allocation0 [shape = 'u32[]', space=smem, size = 0x4, offset = 0x4, fixed_abs, tag = 'smem constant byte address 0x4 - core index']
  #allocation1 [shape = 'u32[144,128]{1,0:T(1,128)}', space=vmem, size = 0x12000, scoped, tag = 'internal scratch']
  %s0 = inlined_call_operand.hbm [shape: f32[8,128], index: 0, kind: input, shape index: {}]
  %s1 = inlined_call_operand.hbm [shape: f32[8,128], index: 1, kind: output, shape index: {}]
  %s2 = sld [smem:[#allocation0]]
  $region18: #{tpu_custom_call.1} parent=0
    _
  %s4 = ssub.s32 1, %s2
  %s5 = scalar_select 0, %s4, %s2
  $region1: #{tpu_custom_call.1} parent=0
    #allocation2 [shape = 'u8[4096]{0}', space=vmem, size = 0x1000, scoped, tag = 'input window, operand 0, single buffered']
    #allocation3 [shape = 's32[1]{0}', space=sflag, size = 0x4, scoped, tag = 'scoped memory for tpu_custom_call.1']
    #allocation4 [shape = 's32[1]{0}', space=sflag, size = 0x4, scoped, tag = 'scoped memory for tpu_custom_call.1']
    #allocation5 [shape = 'u8[4096]{0}', space=vmem, size = 0x1000, scoped, tag = 'output window, operand 0, single buffered']
    %6 = vsyncpa [#allocation3], 0
    %7 = vsyncpa [#allocation4], 0
    // Predicated region
    $region2: #{tpu_custom_call.1} parent=1 // pred_check
      _
    $region3: #{tpu_custom_call.1} parent=1 // pred_check_branch
      %9 = sbr.rel (0) target = $region5
    $region4: #{tpu_custom_call.1} parent=1 // pred_region
      %s11 = ssub.s32 128, 128
      %12 = vsyncadd [#allocation3], %s11
      %s14 = sshll.u32 [#allocation2], 4
      %s15 = int_to_ptr.vmem [resolvable:$true] %s14
      %17 = dma.hbm_to_vmem [thread:$0]  %s0, 128, %s15, [#allocation3]
    $region5: #{tpu_custom_call.1} parent=1 // pred_fallthru
      _
    // Predicated region
    $region6: #{tpu_custom_call.1} parent=1 // pred_check
      _
    $region7: #{tpu_custom_call.1} parent=1 // pred_check_branch
      %19 = sbr.rel (0) target = $region9
    $region8: #{tpu_custom_call.1} parent=1 // pred_region
      %20 = dma.done [#allocation3], 128
    $region9: #{tpu_custom_call.1} parent=1 // pred_fallthru
      _
    %v21 = vld [vmem:[#allocation2] sm:$0xff]
    %22 = vst [vmem:[#allocation5] sm:$0xff] %v21
    // Predicated region
    $region10: #{tpu_custom_call.1} parent=1 // pred_check
      _
    $region11: #{tpu_custom_call.1} parent=1 // pred_check_branch
      %24 = sbr.rel (0) target = $region13
    $region12: #{tpu_custom_call.1} parent=1 // pred_region
      %s26 = ssub.s32 128, 128
      %27 = vsyncadd [#allocation4], %s26
      %s29 = sshll.u32 [#allocation5], 4
      %s30 = int_to_ptr.vmem [resolvable:$true] %s29
      %32 = dma.vmem_to_hbm [thread:$0]  %s30, 128, %s1, [#allocation4]
    $region13: #{tpu_custom_call.1} parent=1 // pred_fallthru
      _
    // Predicated region
    $region14: #{tpu_custom_call.1} parent=1 // pred_check
      _
    $region15: #{tpu_custom_call.1} parent=1 // pred_check_branch
      %34 = sbr.rel (0) target = $region17
    $region16: #{tpu_custom_call.1} parent=1 // pred_region
      %35 = dma.done [#allocation4], 128
    $region17: #{tpu_custom_call.1} parent=1 // pred_fallthru
      _
    %36 = vsyncpa [#allocation3], 1
    %37 = vsyncpa [#allocation4], 1

// kernel: tpu_custom_call.1
$region0: #{tpu_custom_call.1}
  #allocation0 [shape = 'u32[]', space=smem, size = 0x4, offset = 0x4, fixed_abs, tag = 'smem constant byte address 0x4 - core index']
  #allocation1 [shape = 'u32[144,128]{1,0:T(1,128)}', space=vmem, size = 0x12000, scoped, tag = 'internal scratch']
  %s0 = inlined_call_operand.vmem [shape: f32[16,1024], index: 0, kind: input, shape index: {}]
  %s1 = inlined_call_operand.vmem [shape: f32[1024,64], index: 1, kind: input, shape index: {}]
  %s2 = inlined_call_operand.vmem [shape: f32[64,1024], index: 2, kind: input, shape index: {}]
  %s3 = inlined_call_operand.vmem [shape: f32[64,4], index: 3, kind: input, shape index: {}]
  %s4 = inlined_call_operand.vmem [shape: f32[4,64], index: 4, kind: input, shape index: {}]
  %s5 = inlined_call_operand.hbm [shape: f32[16,1024], index: 5, kind: output, shape index: {}]
  %s6 = sld [smem:[#allocation0]]
  $region30: #{tpu_custom_call.1} parent=0
    _
  %s8 = ssub.s32 1, %s6
  %s9 = scalar_select 0, %s8, %s6
  $region1: #{tpu_custom_call.1} parent=0
    #allocation2 [shape = 'u8[65536]{0}', space=vmem, size = 0x10000, scoped, tag = 'output window, operand 0, single buffered']
    #allocation3 [shape = 's32[1]{0}', space=sflag, size = 0x4, scoped, tag = 'scoped memory for tpu_custom_call.1']
    %10 = vsyncpa [#allocation3], 0
    // Predicated region
    $region2: #{tpu_custom_call.1} parent=1 // pred_check
      _
    $region3: #{tpu_custom_call.1} parent=1 // pred_check_branch
      %12 = sbr.rel (0) target = $region5
    $region4: #{tpu_custom_call.1} parent=1 // pred_region
      _
    $region5: #{tpu_custom_call.1} parent=1 // pred_fallthru
      _
    // Predicated region
    $region6: #{tpu_custom_call.1} parent=1 // pred_check
      _
    $region7: #{tpu_custom_call.1} parent=1 // pred_check_branch
      %14 = sbr.rel (0) target = $region9
    $region8: #{tpu_custom_call.1} parent=1 // pred_region
      _
    $region9: #{tpu_custom_call.1} parent=1 // pred_fallthru
      _
    // Predicated region
    $region10: #{tpu_custom_call.1} parent=1 // pred_check
      _
    $region11: #{tpu_custom_call.1} parent=1 // pred_check_branch
      %16 = sbr.rel (0) target = $region13
    $region12: #{tpu_custom_call.1} parent=1 // pred_region
      _
    $region13: #{tpu_custom_call.1} parent=1 // pred_fallthru
      _
    // Predicated region
    $region14: #{tpu_custom_call.1} parent=1 // pred_check
      _
    $region15: #{tpu_custom_call.1} parent=1 // pred_check_branch
      %18 = sbr.rel (0) target = $region17
    $region16: #{tpu_custom_call.1} parent=1 // pred_region
      _
    $region17: #{tpu_custom_call.1} parent=1 // pred_fallthru
      _
    // Predicated region
    $region18: #{tpu_custom_call.1} parent=1 // pred_check
      _
    $region19: #{tpu_custom_call.1} parent=1 // pred_check_branch
      %20 = sbr.rel (0) target = $region21
    $region20: #{tpu_custom_call.1} parent=1 // pred_region
      _
    $region21: #{tpu_custom_call.1} parent=1 // pred_fallthru
      _
    %v21 = vld [vmem:[%s0] sm:$0xff]
    %v22 = vld [vmem:[%s0 + $0x8] sm:$0xff]
    %v23 = vld [vmem:[%s0 + $0x10] sm:$0xff]
    %v24 = vld [vmem:[%s0 + $0x18] sm:$0xff]
    %v25 = vld [vmem:[%s0 + $0x20] sm:$0xff]
    %v26 = vld [vmem:[%s0 + $0x28] sm:$0xff]
    %v27 = vld [vmem:[%s0 + $0x30] sm:$0xff]
    %v28 = vld [vmem:[%s0 + $0x38] sm:$0xff]
    %v29 = vld [vmem:[%s0 + $0x40] sm:$0xff]
    %v30 = vld [vmem:[%s0 + $0x48] sm:$0xff]
    %v31 = vld [vmem:[%s0 + $0x50] sm:$0xff]
    %v32 = vld [vmem:[%s0 + $0x58] sm:$0xff]
    %v33 = vld [vmem:[%s0 + $0x60] sm:$0xff]
    %v34 = vld [vmem:[%s0 + $0x68] sm:$0xff]
    %v35 = vld [vmem:[%s0 + $0x70] sm:$0xff]
    %v36 = vld [vmem:[%s0 + $0x78] sm:$0xff]
    %v37 = vld [vmem:[%s1] sm:$0xff]
    %v38 = vld [vmem:[%s1 + $0x8] sm:$0xff]
    %v39 = vld [vmem:[%s1 + $0x10] sm:$0xff]
    %v40 = vld [vmem:[%s1 + $0x18] sm:$0xff]
    %v41 = vld [vmem:[%s1 + $0x20] sm:$0xff]
    %v42 = vld [vmem:[%s1 + $0x28] sm:$0xff]
    %v43 = vld [vmem:[%s1 + $0x30] sm:$0xff]
    %v44 = vld [vmem:[%s1 + $0x38] sm:$0xff]
    %v45 = vld [vmem:[%s1 + $0x40] sm:$0xff]
    %v46 = vld [vmem:[%s1 + $0x48] sm:$0xff]
    %v47 = vld [vmem:[%s1 + $0x50] sm:$0xff]
    %v48 = vld [vmem:[%s1 + $0x58] sm:$0xff]
    %v49 = vld [vmem:[%s1 + $0x60] sm:$0xff]
    %v50 = vld [vmem:[%s1 + $0x68] sm:$0xff]
    %v51 = vld [vmem:[%s1 + $0x70] sm:$0xff]
    %v52 = vld [vmem:[%s1 + $0x78] sm:$0xff]
    %v53 = vld [vmem:[%s1 + $0x80] sm:$0xff]
    %v54 = vld [vmem:[%s1 + $0x88] sm:$0xff]
    %v55 = vld [vmem:[%s1 + $0x90] sm:$0xff]
    %v56 = vld [vmem:[%s1 + $0x98] sm:$0xff]
    %v57 = vld [vmem:[%s1 + $0xa0] sm:$0xff]
    %v58 = vld [vmem:[%s1 + $0xa8] sm:$0xff]
    %v59 = vld [vmem:[%s1 + $0xb0] sm:$0xff]
    %v60 = vld [vmem:[%s1 + $0xb8] sm:$0xff]
    %v61 = vld [vmem:[%s1 + $0xc0] sm:$0xff]
    %v62 = vld [vmem:[%s1 + $0xc8] sm:$0xff]
    %v63 = vld [vmem:[%s1 + $0xd0] sm:$0xff]
    %v64 = vld [vmem:[%s1 + $0xd8] sm:$0xff]
    %v65 = vld [vmem:[%s1 + $0xe0] sm:$0xff]
    %v66 = vld [vmem:[%s1 + $0xe8] sm:$0xff]
    %v67 = vld [vmem:[%s1 + $0xf0] sm:$0xff]
    %v68 = vld [vmem:[%s1 + $0xf8] sm:$0xff]
    %v69 = vld [vmem:[%s1 + $0x100] sm:$0xff]
    %v70 = vld [vmem:[%s1 + $0x108] sm:$0xff]
    %v71 = vld [vmem:[%s1 + $0x110] sm:$0xff]
    %v72 = vld [vmem:[%s1 + $0x118] sm:$0xff]
    %v73 = vld [vmem:[%s1 + $0x120] sm:$0xff]
    %v74 = vld [vmem:[%s1 + $0x128] sm:$0xff]
    %v75 = vld [vmem:[%s1 + $0x130] sm:$0xff]
    %v76 = vld [vmem:[%s1 + $0x138] sm:$0xff]
    %v77 = vld [vmem:[%s1 + $0x140] sm:$0xff]
    %v78 = vld [vmem:[%s1 + $0x148] sm:$0xff]
    %v79 = vld [vmem:[%s1 + $0x150] sm:$0xff]
    %v80 = vld [vmem:[%s1 + $0x158] sm:$0xff]
    %v81 = vld [vmem:[%s1 + $0x160] sm:$0xff]
    %v82 = vld [vmem:[%s1 + $0x168] sm:$0xff]
    %v83 = vld [vmem:[%s1 + $0x170] sm:$0xff]
    %v84 = vld [vmem:[%s1 + $0x178] sm:$0xff]
    %v85 = vld [vmem:[%s1 + $0x180] sm:$0xff]
    %v86 = vld [vmem:[%s1 + $0x188] sm:$0xff]
    %v87 = vld [vmem:[%s1 + $0x190] sm:$0xff]
    %v88 = vld [vmem:[%s1 + $0x198] sm:$0xff]
    %v89 = vld [vmem:[%s1 + $0x1a0] sm:$0xff]
    %v90 = vld [vmem:[%s1 + $0x1a8] sm:$0xff]
    %v91 = vld [vmem:[%s1 + $0x1b0] sm:$0xff]
    %v92 = vld [vmem:[%s1 + $0x1b8] sm:$0xff]
    %v93 = vld [vmem:[%s1 + $0x1c0] sm:$0xff]
    %v94 = vld [vmem:[%s1 + $0x1c8] sm:$0xff]
    %v95 = vld [vmem:[%s1 + $0x1d0] sm:$0xff]
    %v96 = vld [vmem:[%s1 + $0x1d8] sm:$0xff]
    %v97 = vld [vmem:[%s1 + $0x1e0] sm:$0xff]
    %v98 = vld [vmem:[%s1 + $0x1e8] sm:$0xff]
    %v99 = vld [vmem:[%s1 + $0x1f0] sm:$0xff]
    %v100 = vld [vmem:[%s1 + $0x1f8] sm:$0xff]
    %v101 = vld [vmem:[%s1 + $0x200] sm:$0xff]
    %v102 = vld [vmem:[%s1 + $0x208] sm:$0xff]
    %v103 = vld [vmem:[%s1 + $0x210] sm:$0xff]
    %v104 = vld [vmem:[%s1 + $0x218] sm:$0xff]
    %v105 = vld [vmem:[%s1 + $0x220] sm:$0xff]
    %v106 = vld [vmem:[%s1 + $0x228] sm:$0xff]
    %v107 = vld [vmem:[%s1 + $0x230] sm:$0xff]
    %v108 = vld [vmem:[%s1 + $0x238] sm:$0xff]
    %v109 = vld [vmem:[%s1 + $0x240] sm:$0xff]
    %v110 = vld [vmem:[%s1 + $0x248] sm:$0xff]
    %v111 = vld [vmem:[%s1 + $0x250] sm:$0xff]
    %v112 = vld [vmem:[%s1 + $0x258] sm:$0xff]
    %v113 = vld [vmem:[%s1 + $0x260] sm:$0xff]
    %v114 = vld [vmem:[%s1 + $0x268] sm:$0xff]
    %v115 = vld [vmem:[%s1 + $0x270] sm:$0xff]
    %v116 = vld [vmem:[%s1 + $0x278] sm:$0xff]
    %v117 = vld [vmem:[%s1 + $0x280] sm:$0xff]
    %v118 = vld [vmem:[%s1 + $0x288] sm:$0xff]
    %v119 = vld [vmem:[%s1 + $0x290] sm:$0xff]
    %v120 = vld [vmem:[%s1 + $0x298] sm:$0xff]
    %v121 = vld [vmem:[%s1 + $0x2a0] sm:$0xff]
    %v122 = vld [vmem:[%s1 + $0x2a8] sm:$0xff]
    %v123 = vld [vmem:[%s1 + $0x2b0] sm:$0xff]
    %v124 = vld [vmem:[%s1 + $0x2b8] sm:$0xff]
    %v125 = vld [vmem:[%s1 + $0x2c0] sm:$0xff]
    %v126 = vld [vmem:[%s1 + $0x2c8] sm:$0xff]
    %v127 = vld [vmem:[%s1 + $0x2d0] sm:$0xff]
    %v128 = vld [vmem:[%s1 + $0x2d8] sm:$0xff]
    %v129 = vld [vmem:[%s1 + $0x2e0] sm:$0xff]
    %v130 = vld [vmem:[%s1 + $0x2e8] sm:$0xff]
    %v131 = vld [vmem:[%s1 + $0x2f0] sm:$0xff]
    %v132 = vld [vmem:[%s1 + $0x2f8] sm:$0xff]
    %v133 = vld [vmem:[%s1 + $0x300] sm:$0xff]
    %v134 = vld [vmem:[%s1 + $0x308] sm:$0xff]
    %v135 = vld [vmem:[%s1 + $0x310] sm:$0xff]
    %v136 = vld [vmem:[%s1 + $0x318] sm:$0xff]
    %v137 = vld [vmem:[%s1 + $0x320] sm:$0xff]
    %v138 = vld [vmem:[%s1 + $0x328] sm:$0xff]
    %v139 = vld [vmem:[%s1 + $0x330] sm:$0xff]
    %v140 = vld [vmem:[%s1 + $0x338] sm:$0xff]
    %v141 = vld [vmem:[%s1 + $0x340] sm:$0xff]
    %v142 = vld [vmem:[%s1 + $0x348] sm:$0xff]
    %v143 = vld [vmem:[%s1 + $0x350] sm:$0xff]
    %v144 = vld [vmem:[%s1 + $0x358] sm:$0xff]
    %v145 = vld [vmem:[%s1 + $0x360] sm:$0xff]
    %v146 = vld [vmem:[%s1 + $0x368] sm:$0xff]
    %v147 = vld [vmem:[%s1 + $0x370] sm:$0xff]
    %v148 = vld [vmem:[%s1 + $0x378] sm:$0xff]
    %v149 = vld [vmem:[%s1 + $0x380] sm:$0xff]
    %v150 = vld [vmem:[%s1 + $0x388] sm:$0xff]
    %v151 = vld [vmem:[%s1 + $0x390] sm:$0xff]
    %v152 = vld [vmem:[%s1 + $0x398] sm:$0xff]
    %v153 = vld [vmem:[%s1 + $0x3a0] sm:$0xff]
    %v154 = vld [vmem:[%s1 + $0x3a8] sm:$0xff]
    %v155 = vld [vmem:[%s1 + $0x3b0] sm:$0xff]
    %v156 = vld [vmem:[%s1 + $0x3b8] sm:$0xff]
    %v157 = vld [vmem:[%s1 + $0x3c0] sm:$0xff]
    %v158 = vld [vmem:[%s1 + $0x3c8] sm:$0xff]
    %v159 = vld [vmem:[%s1 + $0x3d0] sm:$0xff]
    %v160 = vld [vmem:[%s1 + $0x3d8] sm:$0xff]
    %v161 = vld [vmem:[%s1 + $0x3e0] sm:$0xff]
    %v162 = vld [vmem:[%s1 + $0x3e8] sm:$0xff]
    %v163 = vld [vmem:[%s1 + $0x3f0] sm:$0xff]
    %v164 = vld [vmem:[%s1 + $0x3f8] sm:$0xff]
    %165 = vmatprep.subr.mxu0 0.0
    %166 = vmatpush1.msra.mxu0 %v37
    %167 = vmatprep.subr.mxu0 0.0
    %168 = vmatpush1.msra.mxu0 %v38
    %169 = vmatprep.subr.mxu0 0.0
    %170 = vmatpush1.msra.mxu0 %v39
    %171 = vmatprep.subr.mxu0 0.0
    %172 = vmatpush1.msra.mxu0 %v40
    %173 = vmatprep.subr.mxu0 0.0
    %174 = vmatpush1.msra.mxu0 %v41
    %175 = vmatprep.subr.mxu0 0.0
    %176 = vmatpush1.msra.mxu0 %v42
    %177 = vmatprep.subr.mxu0 0.0
    %178 = vmatpush1.msra.mxu0 %v43
    %179 = vmatprep.subr.mxu0 0.0
    %180 = vmatpush1.msra.mxu0 %v44
    %181 = vmatprep.subr.mxu0 0.0
    %182 = vmatpush1.msra.mxu0 %v45
    %183 = vmatprep.subr.mxu0 0.0
    %184 = vmatpush1.msra.mxu0 %v46
    %185 = vmatprep.subr.mxu0 0.0
    %186 = vmatpush1.msra.mxu0 %v47
    %187 = vmatprep.subr.mxu0 0.0
    %188 = vmatpush1.msra.mxu0 %v48
    %189 = vmatprep.subr.mxu0 0.0
    %190 = vmatpush1.msra.mxu0 %v49
    %191 = vmatprep.subr.mxu0 0.0
    %192 = vmatpush1.msra.mxu0 %v50
    %193 = vmatprep.subr.mxu0 0.0
    %194 = vmatpush1.msra.mxu0 %v51
    %195 = vmatprep.subr.mxu0 0.0
    %196 = vmatpush1.msra.mxu0 %v52
    %197 = vmatprep.subr.mxu0 0.0
    %198 = vmatpush1.msra.mxu0 %v53
    %199 = vmatprep.subr.mxu0 0.0
    %200 = vmatpush1.msra.mxu0 %v54
    %201 = vmatprep.subr.mxu0 0.0
    %202 = vmatpush1.msra.mxu0 %v55
    %203 = vmatprep.subr.mxu0 0.0
    %204 = vmatpush1.msra.mxu0 %v56
    %205 = vmatprep.subr.mxu0 0.0
    %206 = vmatpush1.msra.mxu0 %v57
    %207 = vmatprep.subr.mxu0 0.0
    %208 = vmatpush1.msra.mxu0 %v58
    %209 = vmatprep.subr.mxu0 0.0
    %210 = vmatpush1.msra.mxu0 %v59
    %211 = vmatprep.subr.mxu0 0.0
    %212 = vmatpush1.msra.mxu0 %v60
    %213 = vmatprep.subr.mxu0 0.0
    %214 = vmatpush1.msra.mxu0 %v61
    %215 = vmatprep.subr.mxu0 0.0
    %216 = vmatpush1.msra.mxu0 %v62
    %217 = vmatprep.subr.mxu0 0.0
    %218 = vmatpush1.msra.mxu0 %v63
    %219 = vmatprep.subr.mxu0 0.0
    %220 = vmatpush1.msra.mxu0 %v64
    %221 = vmatprep.subr.mxu0 0.0
    %222 = vmatpush1.msra.mxu0 %v65
    %223 = vmatprep.subr.mxu0 0.0
    %224 = vmatpush1.msra.mxu0 %v66
    %225 = vmatprep.subr.mxu0 0.0
    %226 = vmatpush1.msra.mxu0 %v67
    %227 = vmatprep.subr.mxu0 0.0
    %228 = vmatpush1.msra.mxu0 %v68
    %229 = vmatprep.mubr.f32.mxu0 %v22
    %230 = vmatmul.mubr.f32.gmra.mrb[0].mxu0 %v21
    %v231 = vpop.f32.mrb[0].mxu0
    %v232 = vadd.f32 0.0, %v231
    %v233 = vpop.f32.mrb[0].mxu0
    %234 = vmatprep.mubr.f32.mxu0 %v30
    %235 = vmatmul.mubr.f32.gmra.mrb[0].mxu0 %v29
    %v236 = vpop.f32.mrb[0].mxu0
    %v237 = vadd.f32 0.0, %v236
    %v238 = vpop.f32.mrb[0].mxu0
    %239 = vdwg.mxu0
    %240 = vmatprep.subr.mxu0 0.0
    %241 = vmatpush1.msra.mxu0 %v69
    %242 = vmatprep.subr.mxu0 0.0
    %243 = vmatpush1.msra.mxu0 %v70
    %244 = vmatprep.subr.mxu0 0.0
    %245 = vmatpush1.msra.mxu0 %v71
    %246 = vmatprep.subr.mxu0 0.0
    %247 = vmatpush1.msra.mxu0 %v72
    %248 = vmatprep.subr.mxu0 0.0
    %249 = vmatpush1.msra.mxu0 %v73
    %250 = vmatprep.subr.mxu0 0.0
    %251 = vmatpush1.msra.mxu0 %v74
    %252 = vmatprep.subr.mxu0 0.0
    %253 = vmatpush1.msra.mxu0 %v75
    %254 = vmatprep.subr.mxu0 0.0
    %255 = vmatpush1.msra.mxu0 %v76
    %256 = vmatprep.subr.mxu0 0.0
    %257 = vmatpush1.msra.mxu0 %v77
    %258 = vmatprep.subr.mxu0 0.0
    %259 = vmatpush1.msra.mxu0 %v78
    %260 = vmatprep.subr.mxu0 0.0
    %261 = vmatpush1.msra.mxu0 %v79
    %262 = vmatprep.subr.mxu0 0.0
    %263 = vmatpush1.msra.mxu0 %v80
    %264 = vmatprep.subr.mxu0 0.0
    %265 = vmatpush1.msra.mxu0 %v81
    %266 = vmatprep.subr.mxu0 0.0
    %267 = vmatpush1.msra.mxu0 %v82
    %268 = vmatprep.subr.mxu0 0.0
    %269 = vmatpush1.msra.mxu0 %v83
    %270 = vmatprep.subr.mxu0 0.0
    %271 = vmatpush1.msra.mxu0 %v84
    %272 = vmatprep.subr.mxu0 0.0
    %273 = vmatpush1.msra.mxu0 %v85
    %274 = vmatprep.subr.mxu0 0.0
    %275 = vmatpush1.msra.mxu0 %v86
    %276 = vmatprep.subr.mxu0 0.0
    %277 = vmatpush1.msra.mxu0 %v87
    %278 = vmatprep.subr.mxu0 0.0
    %279 = vmatpush1.msra.mxu0 %v88
    %280 = vmatprep.subr.mxu0 0.0
    %281 = vmatpush1.msra.mxu0 %v89
    %282 = vmatprep.subr.mxu0 0.0
    %283 = vmatpush1.msra.mxu0 %v90
    %284 = vmatprep.subr.mxu0 0.0
    %285 = vmatpush1.msra.mxu0 %v91
    %286 = vmatprep.subr.mxu0 0.0
    %287 = vmatpush1.msra.mxu0 %v92
    %288 = vmatprep.subr.mxu0 0.0
    %289 = vmatpush1.msra.mxu0 %v93
    %290 = vmatprep.subr.mxu0 0.0
    %291 = vmatpush1.msra.mxu0 %v94
    %292 = vmatprep.subr.mxu0 0.0
    %293 = vmatpush1.msra.mxu0 %v95
    %294 = vmatprep.subr.mxu0 0.0
    %295 = vmatpush1.msra.mxu0 %v96
    %296 = vmatprep.subr.mxu0 0.0
    %297 = vmatpush1.msra.mxu0 %v97
    %298 = vmatprep.subr.mxu0 0.0
    %299 = vmatpush1.msra.mxu0 %v98
    %300 = vmatprep.subr.mxu0 0.0
    %301 = vmatpush1.msra.mxu0 %v99
    %302 = vmatprep.subr.mxu0 0.0
    %303 = vmatpush1.msra.mxu0 %v100
    %304 = vmatprep.mubr.f32.mxu0 %v24
    %305 = vmatmul.mubr.f32.gmra.mrb[0].mxu0 %v23
    %v306 = vpop.f32.mrb[0].mxu0
    %v307 = vadd.f32 %v232, %v306
    %v308 = vpop.f32.mrb[0].mxu0
    %309 = vmatprep.mubr.f32.mxu0 %v32
    %310 = vmatmul.mubr.f32.gmra.mrb[0].mxu0 %v31
    %v311 = vpop.f32.mrb[0].mxu0
    %v312 = vadd.f32 %v237, %v311
    %v313 = vpop.f32.mrb[0].mxu0
    %314 = vdwg.mxu0
    %315 = vmatprep.subr.mxu0 0.0
    %316 = vmatpush1.msra.mxu0 %v101
    %317 = vmatprep.subr.mxu0 0.0
    %318 = vmatpush1.msra.mxu0 %v102
    %319 = vmatprep.subr.mxu0 0.0
    %320 = vmatpush1.msra.mxu0 %v103
    %321 = vmatprep.subr.mxu0 0.0
    %322 = vmatpush1.msra.mxu0 %v104
    %323 = vmatprep.subr.mxu0 0.0
    %324 = vmatpush1.msra.mxu0 %v105
    %325 = vmatprep.subr.mxu0 0.0
    %326 = vmatpush1.msra.mxu0 %v106
    %327 = vmatprep.subr.mxu0 0.0
    %328 = vmatpush1.msra.mxu0 %v107
    %329 = vmatprep.subr.mxu0 0.0
    %330 = vmatpush1.msra.mxu0 %v108
    %331 = vmatprep.subr.mxu0 0.0
    %332 = vmatpush1.msra.mxu0 %v109
    %333 = vmatprep.subr.mxu0 0.0
    %334 = vmatpush1.msra.mxu0 %v110
    %335 = vmatprep.subr.mxu0 0.0
    %336 = vmatpush1.msra.mxu0 %v111
    %337 = vmatprep.subr.mxu0 0.0
    %338 = vmatpush1.msra.mxu0 %v112
    %339 = vmatprep.subr.mxu0 0.0
    %340 = vmatpush1.msra.mxu0 %v113
    %341 = vmatprep.subr.mxu0 0.0
    %342 = vmatpush1.msra.mxu0 %v114
    %343 = vmatprep.subr.mxu0 0.0
    %344 = vmatpush1.msra.mxu0 %v115
    %345 = vmatprep.subr.mxu0 0.0
    %346 = vmatpush1.msra.mxu0 %v116
    %347 = vmatprep.subr.mxu0 0.0
    %348 = vmatpush1.msra.mxu0 %v117
    %349 = vmatprep.subr.mxu0 0.0
    %350 = vmatpush1.msra.mxu0 %v118
    %351 = vmatprep.subr.mxu0 0.0
    %352 = vmatpush1.msra.mxu0 %v119
    %353 = vmatprep.subr.mxu0 0.0
    %354 = vmatpush1.msra.mxu0 %v120
    %355 = vmatprep.subr.mxu0 0.0
    %356 = vmatpush1.msra.mxu0 %v121
    %357 = vmatprep.subr.mxu0 0.0
    %358 = vmatpush1.msra.mxu0 %v122
    %359 = vmatprep.subr.mxu0 0.0
    %360 = vmatpush1.msra.mxu0 %v123
    %361 = vmatprep.subr.mxu0 0.0
    %362 = vmatpush1.msra.mxu0 %v124
    %363 = vmatprep.subr.mxu0 0.0
    %364 = vmatpush1.msra.mxu0 %v125
    %365 = vmatprep.subr.mxu0 0.0
    %366 = vmatpush1.msra.mxu0 %v126
    %367 = vmatprep.subr.mxu0 0.0
    %368 = vmatpush1.msra.mxu0 %v127
    %369 = vmatprep.subr.mxu0 0.0
    %370 = vmatpush1.msra.mxu0 %v128
    %371 = vmatprep.subr.mxu0 0.0
    %372 = vmatpush1.msra.mxu0 %v129
    %373 = vmatprep.subr.mxu0 0.0
    %374 = vmatpush1.msra.mxu0 %v130
    %375 = vmatprep.subr.mxu0 0.0
    %376 = vmatpush1.msra.mxu0 %v131
    %377 = vmatprep.subr.mxu0 0.0
    %378 = vmatpush1.msra.mxu0 %v132
    %379 = vmatprep.mubr.f32.mxu0 %v26
    %380 = vmatmul.mubr.f32.gmra.mrb[0].mxu0 %v25
    %v381 = vpop.f32.mrb[0].mxu0
    %v382 = vadd.f32 %v307, %v381
    %v383 = vpop.f32.mrb[0].mxu0
    %384 = vmatprep.mubr.f32.mxu0 %v34
    %385 = vmatmul.mubr.f32.gmra.mrb[0].mxu0 %v33
    %v386 = vpop.f32.mrb[0].mxu0
    %v387 = vadd.f32 %v312, %v386
    %v388 = vpop.f32.mrb[0].mxu0
    %389 = vdwg.mxu0
    %390 = vmatprep.subr.mxu0 0.0
    %391 = vmatpush1.msra.mxu0 %v133
    %392 = vmatprep.subr.mxu0 0.0
    %393 = vmatpush1.msra.mxu0 %v134
    %394 = vmatprep.subr.mxu0 0.0
    %395 = vmatpush1.msra.mxu0 %v135
    %396 = vmatprep.subr.mxu0 0.0
    %397 = vmatpush1.msra.mxu0 %v136
    %398 = vmatprep.subr.mxu0 0.0
    %399 = vmatpush1.msra.mxu0 %v137
    %400 = vmatprep.subr.mxu0 0.0
    %401 = vmatpush1.msra.mxu0 %v138
    %402 = vmatprep.subr.mxu0 0.0
    %403 = vmatpush1.msra.mxu0 %v139
    %404 = vmatprep.subr.mxu0 0.0
    %405 = vmatpush1.msra.mxu0 %v140
    %406 = vmatprep.subr.mxu0 0.0
    %407 = vmatpush1.msra.mxu0 %v141
    %408 = vmatprep.subr.mxu0 0.0
    %409 = vmatpush1.msra.mxu0 %v142
    %410 = vmatprep.subr.mxu0 0.0
    %411 = vmatpush1.msra.mxu0 %v143
    %412 = vmatprep.subr.mxu0 0.0
    %413 = vmatpush1.msra.mxu0 %v144
    %414 = vmatprep.subr.mxu0 0.0
    %415 = vmatpush1.msra.mxu0 %v145
    %416 = vmatprep.subr.mxu0 0.0
    %417 = vmatpush1.msra.mxu0 %v146
    %418 = vmatprep.subr.mxu0 0.0
    %419 = vmatpush1.msra.mxu0 %v147
    %420 = vmatprep.subr.mxu0 0.0
    %421 = vmatpush1.msra.mxu0 %v148
    %422 = vmatprep.subr.mxu0 0.0
    %423 = vmatpush1.msra.mxu0 %v149
    %424 = vmatprep.subr.mxu0 0.0
    %425 = vmatpush1.msra.mxu0 %v150
    %426 = vmatprep.subr.mxu0 0.0
    %427 = vmatpush1.msra.mxu0 %v151
    %428 = vmatprep.subr.mxu0 0.0
    %429 = vmatpush1.msra.mxu0 %v152
    %430 = vmatprep.subr.mxu0 0.0
    %431 = vmatpush1.msra.mxu0 %v153
    %432 = vmatprep.subr.mxu0 0.0
    %433 = vmatpush1.msra.mxu0 %v154
    %434 = vmatprep.subr.mxu0 0.0
    %435 = vmatpush1.msra.mxu0 %v155
    %436 = vmatprep.subr.mxu0 0.0
    %437 = vmatpush1.msra.mxu0 %v156
    %438 = vmatprep.subr.mxu0 0.0
    %439 = vmatpush1.msra.mxu0 %v157
    %440 = vmatprep.subr.mxu0 0.0
    %441 = vmatpush1.msra.mxu0 %v158
    %442 = vmatprep.subr.mxu0 0.0
    %443 = vmatpush1.msra.mxu0 %v159
    %444 = vmatprep.subr.mxu0 0.0
    %445 = vmatpush1.msra.mxu0 %v160
    %446 = vmatprep.subr.mxu0 0.0
    %447 = vmatpush1.msra.mxu0 %v161
    %448 = vmatprep.subr.mxu0 0.0
    %449 = vmatpush1.msra.mxu0 %v162
    %450 = vmatprep.subr.mxu0 0.0
    %451 = vmatpush1.msra.mxu0 %v163
    %452 = vmatprep.subr.mxu0 0.0
    %453 = vmatpush1.msra.mxu0 %v164
    %454 = vmatprep.mubr.f32.mxu0 %v28
    %455 = vmatmul.mubr.f32.gmra.mrb[0].mxu0 %v27
    %v456 = vpop.f32.mrb[0].mxu0
    %v457 = vadd.f32 %v382, %v456
    %v458 = vpop.f32.mrb[0].mxu0
    %459 = vmatprep.mubr.f32.mxu0 %v36
    %460 = vmatmul.mubr.f32.gmra.mrb[0].mxu0 %v35
    %v461 = vpop.f32.mrb[0].mxu0
    %v462 = vadd.f32 %v387, %v461
    %v463 = vpop.f32.mrb[0].mxu0
    %464 = vdwg.mxu0
    %v465 = vld [vmem:[%s3] sm:$0xff]
    %v466 = vld [vmem:[%s3 + $0x8] sm:$0xff]
    %v467 = vld [vmem:[%s3 + $0x10] sm:$0xff]
    %v468 = vld [vmem:[%s3 + $0x18] sm:$0xff]
    %v469 = vld [vmem:[%s3 + $0x20] sm:$0xff]
    %v470 = vld [vmem:[%s3 + $0x28] sm:$0xff]
    %v471 = vld [vmem:[%s3 + $0x30] sm:$0xff]
    %v472 = vld [vmem:[%s3 + $0x38] sm:$0xff]
    %vm473 = vcmask 523264
    %v475 = vsel %vm473, %v457, 0
    %v478 = vsel %vm473, %v462, 0
    %480 = vmatprep.subr.mxu0 0.0
    %481 = vmatpush1.msra.mxu0 %v465
    %482 = vmatprep.subr.mxu0 0.0
    %483 = vmatpush1.msra.mxu0 %v466
    %484 = vmatprep.subr.mxu0 0.0
    %485 = vmatpush1.msra.mxu0 %v467
    %486 = vmatprep.subr.mxu0 0.0
    %487 = vmatpush1.msra.mxu0 %v468
    %488 = vmatprep.subr.mxu0 0.0
    %489 = vmatpush1.msra.mxu0 %v469
    %490 = vmatprep.subr.mxu0 0.0
    %491 = vmatpush1.msra.mxu0 %v470
    %492 = vmatprep.subr.mxu0 0.0
    %493 = vmatpush1.msra.mxu0 %v471
    %494 = vmatprep.subr.mxu0 0.0
    %495 = vmatpush1.msra.mxu0 %v472
    %496 = vmatprep.subr.mxu0 0.0
    %497 = vmatpush1.msra.mxu0 0.0
    %498 = vmatprep.subr.mxu0 0.0
    %499 = vmatpush1.msra.mxu0 0.0
    %500 = vmatprep.subr.mxu0 0.0
    %501 = vmatpush1.msra.mxu0 0.0
    %502 = vmatprep.subr.mxu0 0.0
    %503 = vmatpush1.msra.mxu0 0.0
    %504 = vmatprep.subr.mxu0 0.0
    %505 = vmatpush1.msra.mxu0 0.0
    %506 = vmatprep.subr.mxu0 0.0
    %507 = vmatpush1.msra.mxu0 0.0
    %508 = vmatprep.subr.mxu0 0.0
    %509 = vmatpush1.msra.mxu0 0.0
    %510 = vmatprep.subr.mxu0 0.0
    %511 = vmatpush1.msra.mxu0 0.0
    %512 = vmatprep.subr.mxu0 0.0
    %513 = vmatpush1.msra.mxu0 0.0
    %514 = vmatprep.subr.mxu0 0.0
    %515 = vmatpush1.msra.mxu0 0.0
    %516 = vmatprep.subr.mxu0 0.0
    %517 = vmatpush1.msra.mxu0 0.0
    %518 = vmatprep.subr.mxu0 0.0
    %519 = vmatpush1.msra.mxu0 0.0
    %520 = vmatprep.subr.mxu0 0.0
    %521 = vmatpush1.msra.mxu0 0.0
    %522 = vmatprep.subr.mxu0 0.0
    %523 = vmatpush1.msra.mxu0 0.0
    %524 = vmatprep.subr.mxu0 0.0
    %525 = vmatpush1.msra.mxu0 0.0
    %526 = vmatprep.subr.mxu0 0.0
    %527 = vmatpush1.msra.mxu0 0.0
    %528 = vmatprep.subr.mxu0 0.0
    %529 = vmatpush1.msra.mxu0 0.0
    %530 = vmatprep.subr.mxu0 0.0
    %531 = vmatpush1.msra.mxu0 0.0
    %532 = vmatprep.subr.mxu0 0.0
    %533 = vmatpush1.msra.mxu0 0.0
    %534 = vmatprep.subr.mxu0 0.0
    %535 = vmatpush1.msra.mxu0 0.0
    %536 = vmatprep.subr.mxu0 0.0
    %537 = vmatpush1.msra.mxu0 0.0
    %538 = vmatprep.subr.mxu0 0.0
    %539 = vmatpush1.msra.mxu0 0.0
    %540 = vmatprep.subr.mxu0 0.0
    %541 = vmatpush1.msra.mxu0 0.0
    %542 = vmatprep.subr.mxu0 0.0
    %543 = vmatpush1.msra.mxu0 0.0
    %544 = vmatprep.mubr.f32.mxu0 0.0
    %545 = vmatmul.mubr.f32.gmra.mrb[0].mxu0 %v475
    %v546 = vpop.f32.mrb[0].mxu0
    %v547 = vadd.f32 0.0, %v546
    %v548 = vpop.f32.mrb[0].mxu0
    %549 = vmatprep.mubr.f32.mxu0 0.0
    %550 = vmatmul.mubr.f32.gmra.mrb[0].mxu0 %v478
    %v551 = vpop.f32.mrb[0].mxu0
    %v552 = vadd.f32 0.0, %v551
    %v553 = vpop.f32.mrb[0].mxu0
    %554 = vdwg.mxu0
    %v555 = vmax.f32 %v547, 0.0
    %v556 = vmax.f32 %v552, 0.0
    %v557 = vld [vmem:[%s4] sm:$0xf]
    %vm558 = vcmask 31744
    %v560 = vsel %vm558, %v555, 0
    %v563 = vsel %vm558, %v556, 0
    %vm565 = vcmask 1043456
    %v567 = vsel %vm565, %v557, 0
    %569 = vmatprep.subr.mxu0 0.0
    %570 = vmatpush1.msra.mxu0 %v567
    %571 = vmatprep.subr.mxu0 0.0
    %572 = vmatpush1.msra.mxu0 0.0
    %573 = vmatprep.subr.mxu0 0.0
    %574 = vmatpush1.msra.mxu0 0.0
    %575 = vmatprep.subr.mxu0 0.0
    %576 = vmatpush1.msra.mxu0 0.0
    %577 = vmatprep.subr.mxu0 0.0
    %578 = vmatpush1.msra.mxu0 0.0
    %579 = vmatprep.subr.mxu0 0.0
    %580 = vmatpush1.msra.mxu0 0.0
    %581 = vmatprep.subr.mxu0 0.0
    %582 = vmatpush1.msra.mxu0 0.0
    %583 = vmatprep.subr.mxu0 0.0
    %584 = vmatpush1.msra.mxu0 0.0
    %585 = vmatprep.subr.mxu0 0.0
    %586 = vmatpush1.msra.mxu0 0.0
    %587 = vmatprep.subr.mxu0 0.0
    %588 = vmatpush1.msra.mxu0 0.0
    %589 = vmatprep.subr.mxu0 0.0
    %590 = vmatpush1.msra.mxu0 0.0
    %591 = vmatprep.subr.mxu0 0.0
    %592 = vmatpush1.msra.mxu0 0.0
    %593 = vmatprep.subr.mxu0 0.0
    %594 = vmatpush1.msra.mxu0 0.0
    %595 = vmatprep.subr.mxu0 0.0
    %596 = vmatpush1.msra.mxu0 0.0
    %597 = vmatprep.subr.mxu0 0.0
    %598 = vmatpush1.msra.mxu0 0.0
    %599 = vmatprep.subr.mxu0 0.0
    %600 = vmatpush1.msra.mxu0 0.0
    %601 = vmatprep.subr.mxu0 0.0
    %602 = vmatpush1.msra.mxu0 0.0
    %603 = vmatprep.subr.mxu0 0.0
    %604 = vmatpush1.msra.mxu0 0.0
    %605 = vmatprep.subr.mxu0 0.0
    %606 = vmatpush1.msra.mxu0 0.0
    %607 = vmatprep.subr.mxu0 0.0
    %608 = vmatpush1.msra.mxu0 0.0
    %609 = vmatprep.subr.mxu0 0.0
    %610 = vmatpush1.msra.mxu0 0.0
    %611 = vmatprep.subr.mxu0 0.0
    %612 = vmatpush1.msra.mxu0 0.0
    %613 = vmatprep.subr.mxu0 0.0
    %614 = vmatpush1.msra.mxu0 0.0
    %615 = vmatprep.subr.mxu0 0.0
    %616 = vmatpush1.msra.mxu0 0.0
    %617 = vmatprep.subr.mxu0 0.0
    %618 = vmatpush1.msra.mxu0 0.0
    %619 = vmatprep.subr.mxu0 0.0
    %620 = vmatpush1.msra.mxu0 0.0
    %621 = vmatprep.subr.mxu0 0.0
    %622 = vmatpush1.msra.mxu0 0.0
    %623 = vmatprep.subr.mxu0 0.0
    %624 = vmatpush1.msra.mxu0 0.0
    %625 = vmatprep.subr.mxu0 0.0
    %626 = vmatpush1.msra.mxu0 0.0
    %627 = vmatprep.subr.mxu0 0.0
    %628 = vmatpush1.msra.mxu0 0.0
    %629 = vmatprep.subr.mxu0 0.0
    %630 = vmatpush1.msra.mxu0 0.0
    %631 = vmatprep.subr.mxu0 0.0
    %632 = vmatpush1.msra.mxu0 0.0
    %633 = vmatprep.mubr.f32.mxu0 0.0
    %634 = vmatmul.mubr.f32.gmra.mrb[0].mxu0 %v560
    %v635 = vpop.f32.mrb[0].mxu0
    %v636 = vadd.f32 0.0, %v635
    %v637 = vpop.f32.mrb[0].mxu0
    %638 = vmatprep.mubr.f32.mxu0 0.0
    %639 = vmatmul.mubr.f32.gmra.mrb[0].mxu0 %v563
    %v640 = vpop.f32.mrb[0].mxu0
    %v641 = vadd.f32 0.0, %v640
    %v642 = vpop.f32.mrb[0].mxu0
    %643 = vdwg.mxu0
    %v644 = vxor.u32 %v636, 2147483648
    %v645 = vxor.u32 %v641, 2147483648
    %v646 = vmul.f32 %v644, 1.442695
    %v647 = vpow.pop %v646
    %v648 = vmul.f32 %v645, 1.442695
    %v649 = vpow.pop %v648
    %v650 = vadd.f32 %v647, 1.0
    %v651 = vadd.f32 %v649, 1.0
    %v652 = vrcp.pop %v650
    %v653 = vmul.f32 1.0, %v652
    %v654 = vrcp.pop %v651
    %v655 = vmul.f32 1.0, %v654
    %v656 = vld [vmem:[%s2] sm:$0xff]
    %v657 = vld [vmem:[%s2 + $0x8] sm:$0xff]
    %v658 = vld [vmem:[%s2 + $0x10] sm:$0xff]
    %v659 = vld [vmem:[%s2 + $0x18] sm:$0xff]
    %v660 = vld [vmem:[%s2 + $0x20] sm:$0xff]
    %v661 = vld [vmem:[%s2 + $0x28] sm:$0xff]
    %v662 = vld [vmem:[%s2 + $0x30] sm:$0xff]
    %v663 = vld [vmem:[%s2 + $0x38] sm:$0xff]
    %v664 = vld [vmem:[%s2 + $0x40] sm:$0xff]
    %v665 = vld [vmem:[%s2 + $0x48] sm:$0xff]
    %v666 = vld [vmem:[%s2 + $0x50] sm:$0xff]
    %v667 = vld [vmem:[%s2 + $0x58] sm:$0xff]
    %v668 = vld [vmem:[%s2 + $0x60] sm:$0xff]
    %v669 = vld [vmem:[%s2 + $0x68] sm:$0xff]
    %v670 = vld [vmem:[%s2 + $0x70] sm:$0xff]
    %v671 = vld [vmem:[%s2 + $0x78] sm:$0xff]
    %v672 = vld [vmem:[%s2 + $0x80] sm:$0xff]
    %v673 = vld [vmem:[%s2 + $0x88] sm:$0xff]
    %v674 = vld [vmem:[%s2 + $0x90] sm:$0xff]
    %v675 = vld [vmem:[%s2 + $0x98] sm:$0xff]
    %v676 = vld [vmem:[%s2 + $0xa0] sm:$0xff]
    %v677 = vld [vmem:[%s2 + $0xa8] sm:$0xff]
    %v678 = vld [vmem:[%s2 + $0xb0] sm:$0xff]
    %v679 = vld [vmem:[%s2 + $0xb8] sm:$0xff]
    %v680 = vld [vmem:[%s2 + $0xc0] sm:$0xff]
    %v681 = vld [vmem:[%s2 + $0xc8] sm:$0xff]
    %v682 = vld [vmem:[%s2 + $0xd0] sm:$0xff]
    %v683 = vld [vmem:[%s2 + $0xd8] sm:$0xff]
    %v684 = vld [vmem:[%s2 + $0xe0] sm:$0xff]
    %v685 = vld [vmem:[%s2 + $0xe8] sm:$0xff]
    %v686 = vld [vmem:[%s2 + $0xf0] sm:$0xff]
    %v687 = vld [vmem:[%s2 + $0xf8] sm:$0xff]
    %v688 = vld [vmem:[%s2 + $0x100] sm:$0xff]
    %v689 = vld [vmem:[%s2 + $0x108] sm:$0xff]
    %v690 = vld [vmem:[%s2 + $0x110] sm:$0xff]
    %v691 = vld [vmem:[%s2 + $0x118] sm:$0xff]
    %v692 = vld [vmem:[%s2 + $0x120] sm:$0xff]
    %v693 = vld [vmem:[%s2 + $0x128] sm:$0xff]
    %v694 = vld [vmem:[%s2 + $0x130] sm:$0xff]
    %v695 = vld [vmem:[%s2 + $0x138] sm:$0xff]
    %v696 = vld [vmem:[%s2 + $0x140] sm:$0xff]
    %v697 = vld [vmem:[%s2 + $0x148] sm:$0xff]
    %v698 = vld [vmem:[%s2 + $0x150] sm:$0xff]
    %v699 = vld [vmem:[%s2 + $0x158] sm:$0xff]
    %v700 = vld [vmem:[%s2 + $0x160] sm:$0xff]
    %v701 = vld [vmem:[%s2 + $0x168] sm:$0xff]
    %v702 = vld [vmem:[%s2 + $0x170] sm:$0xff]
    %v703 = vld [vmem:[%s2 + $0x178] sm:$0xff]
    %v704 = vld [vmem:[%s2 + $0x180] sm:$0xff]
    %v705 = vld [vmem:[%s2 + $0x188] sm:$0xff]
    %v706 = vld [vmem:[%s2 + $0x190] sm:$0xff]
    %v707 = vld [vmem:[%s2 + $0x198] sm:$0xff]
    %v708 = vld [vmem:[%s2 + $0x1a0] sm:$0xff]
    %v709 = vld [vmem:[%s2 + $0x1a8] sm:$0xff]
    %v710 = vld [vmem:[%s2 + $0x1b0] sm:$0xff]
    %v711 = vld [vmem:[%s2 + $0x1b8] sm:$0xff]
    %v712 = vld [vmem:[%s2 + $0x1c0] sm:$0xff]
    %v713 = vld [vmem:[%s2 + $0x1c8] sm:$0xff]
    %v714 = vld [vmem:[%s2 + $0x1d0] sm:$0xff]
    %v715 = vld [vmem:[%s2 + $0x1d8] sm:$0xff]
    %v716 = vld [vmem:[%s2 + $0x1e0] sm:$0xff]
    %v717 = vld [vmem:[%s2 + $0x1e8] sm:$0xff]
    %v718 = vld [vmem:[%s2 + $0x1f0] sm:$0xff]
    %v719 = vld [vmem:[%s2 + $0x1f8] sm:$0xff]
    %v721 = vsel %vm473, %v653, 0
    %v724 = vsel %vm473, %v655, 0
    %726 = vmatprep.subr.mxu0 %v657
    %727 = vmatpush1.msra.mxu0 %v656
    %728 = vmatprep.subr.mxu0 %v665
    %729 = vmatpush1.msra.mxu0 %v664
    %730 = vmatprep.subr.mxu0 %v673
    %731 = vmatpush1.msra.mxu0 %v672
    %732 = vmatprep.subr.mxu0 %v681
    %733 = vmatpush1.msra.mxu0 %v680
    %734 = vmatprep.subr.mxu0 %v689
    %735 = vmatpush1.msra.mxu0 %v688
    %736 = vmatprep.subr.mxu0 %v697
    %737 = vmatpush1.msra.mxu0 %v696
    %738 = vmatprep.subr.mxu0 %v705
    %739 = vmatpush1.msra.mxu0 %v704
    %740 = vmatprep.subr.mxu0 %v713
    %741 = vmatpush1.msra.mxu0 %v712
    %742 = vmatprep.subr.mxu0 0.0
    %743 = vmatpush1.msra.mxu0 0.0
    %744 = vmatprep.subr.mxu0 0.0
    %745 = vmatpush1.msra.mxu0 0.0
    %746 = vmatprep.subr.mxu0 0.0
    %747 = vmatpush1.msra.mxu0 0.0
    %748 = vmatprep.subr.mxu0 0.0
    %749 = vmatpush1.msra.mxu0 0.0
    %750 = vmatprep.subr.mxu0 0.0
    %751 = vmatpush1.msra.mxu0 0.0
    %752 = vmatprep.subr.mxu0 0.0
    %753 = vmatpush1.msra.mxu0 0.0
    %754 = vmatprep.subr.mxu0 0.0
    %755 = vmatpush1.msra.mxu0 0.0
    %756 = vmatprep.subr.mxu0 0.0
    %757 = vmatpush1.msra.mxu0 0.0
    %758 = vmatprep.subr.mxu0 0.0
    %759 = vmatpush1.msra.mxu0 0.0
    %760 = vmatprep.subr.mxu0 0.0
    %761 = vmatpush1.msra.mxu0 0.0
    %762 = vmatprep.subr.mxu0 0.0
    %763 = vmatpush1.msra.mxu0 0.0
    %764 = vmatprep.subr.mxu0 0.0
    %765 = vmatpush1.msra.mxu0 0.0
    %766 = vmatprep.subr.mxu0 0.0
    %767 = vmatpush1.msra.mxu0 0.0
    %768 = vmatprep.subr.mxu0 0.0
    %769 = vmatpush1.msra.mxu0 0.0
    %770 = vmatprep.subr.mxu0 0.0
    %771 = vmatpush1.msra.mxu0 0.0
    %772 = vmatprep.subr.mxu0 0.0
    %773 = vmatpush1.msra.mxu0 0.0
    %774 = vmatprep.subr.mxu0 0.0
    %775 = vmatpush1.msra.mxu0 0.0
    %776 = vmatprep.subr.mxu0 0.0
    %777 = vmatpush1.msra.mxu0 0.0
    %778 = vmatprep.subr.mxu0 0.0
    %779 = vmatpush1.msra.mxu0 0.0
    %780 = vmatprep.subr.mxu0 0.0
    %781 = vmatpush1.msra.mxu0 0.0
    %782 = vmatprep.subr.mxu0 0.0
    %783 = vmatpush1.msra.mxu0 0.0
    %784 = vmatprep.subr.mxu0 0.0
    %785 = vmatpush1.msra.mxu0 0.0
    %786 = vmatprep.subr.mxu0 0.0
    %787 = vmatpush1.msra.mxu0 0.0
    %788 = vmatprep.subr.mxu0 0.0
    %789 = vmatpush1.msra.mxu0 0.0
    %790 = vmatprep.mubr.f32.mxu0 0.0
    %791 = vmatmul.mubr.f32.gmra.mrb[0].mxu0 %v721
    %v792 = vpop.f32.mrb[0].mxu0
    %v793 = vadd.f32 0.0, %v792
    %v794 = vpop.f32.mrb[0].mxu0
    %v795 = vadd.f32 0.0, %v794
    %796 = vmatprep.mubr.f32.mxu0 0.0
    %797 = vmatmul.mubr.f32.gmra.mrb[0].mxu0 %v724
    %v798 = vpop.f32.mrb[0].mxu0
    %v799 = vadd.f32 0.0, %v798
    %v800 = vpop.f32.mrb[0].mxu0
    %v801 = vadd.f32 0.0, %v800
    %802 = vdwg.mxu0
    %803 = vmatprep.subr.mxu0 %v659
    %804 = vmatpush1.msra.mxu0 %v658
    %805 = vmatprep.subr.mxu0 %v667
    %806 = vmatpush1.msra.mxu0 %v666
    %807 = vmatprep.subr.mxu0 %v675
    %808 = vmatpush1.msra.mxu0 %v674
    %809 = vmatprep.subr.mxu0 %v683
    %810 = vmatpush1.msra.mxu0 %v682
    %811 = vmatprep.subr.mxu0 %v691
    %812 = vmatpush1.msra.mxu0 %v690
    %813 = vmatprep.subr.mxu0 %v699
    %814 = vmatpush1.msra.mxu0 %v698
    %815 = vmatprep.subr.mxu0 %v707
    %816 = vmatpush1.msra.mxu0 %v706
    %817 = vmatprep.subr.mxu0 %v715
    %818 = vmatpush1.msra.mxu0 %v714
    %819 = vmatprep.subr.mxu0 0.0
    %820 = vmatpush1.msra.mxu0 0.0
    %821 = vmatprep.subr.mxu0 0.0
    %822 = vmatpush1.msra.mxu0 0.0
    %823 = vmatprep.subr.mxu0 0.0
    %824 = vmatpush1.msra.mxu0 0.0
    %825 = vmatprep.subr.mxu0 0.0
    %826 = vmatpush1.msra.mxu0 0.0
    %827 = vmatprep.subr.mxu0 0.0
    %828 = vmatpush1.msra.mxu0 0.0
    %829 = vmatprep.subr.mxu0 0.0
    %830 = vmatpush1.msra.mxu0 0.0
    %831 = vmatprep.subr.mxu0 0.0
    %832 = vmatpush1.msra.mxu0 0.0
    %833 = vmatprep.subr.mxu0 0.0
    %834 = vmatpush1.msra.mxu0 0.0
    %835 = vmatprep.subr.mxu0 0.0
    %836 = vmatpush1.msra.mxu0 0.0
    %837 = vmatprep.subr.mxu0 0.0
    %838 = vmatpush1.msra.mxu0 0.0
    %839 = vmatprep.subr.mxu0 0.0
    %840 = vmatpush1.msra.mxu0 0.0
    %841 = vmatprep.subr.mxu0 0.0
    %842 = vmatpush1.msra.mxu0 0.0
    %843 = vmatprep.subr.mxu0 0.0
    %844 = vmatpush1.msra.mxu0 0.0
    %845 = vmatprep.subr.mxu0 0.0
    %846 = vmatpush1.msra.mxu0 0.0
    %847 = vmatprep.subr.mxu0 0.0
    %848 = vmatpush1.msra.mxu0 0.0
    %849 = vmatprep.subr.mxu0 0.0
    %850 = vmatpush1.msra.mxu0 0.0
    %851 = vmatprep.subr.mxu0 0.0
    %852 = vmatpush1.msra.mxu0 0.0
    %853 = vmatprep.subr.mxu0 0.0
    %854 = vmatpush1.msra.mxu0 0.0
    %855 = vmatprep.subr.mxu0 0.0
    %856 = vmatpush1.msra.mxu0 0.0
    %857 = vmatprep.subr.mxu0 0.0
    %858 = vmatpush1.msra.mxu0 0.0
    %859 = vmatprep.subr.mxu0 0.0
    %860 = vmatpush1.msra.mxu0 0.0
    %861 = vmatprep.subr.mxu0 0.0
    %862 = vmatpush1.msra.mxu0 0.0
    %863 = vmatprep.subr.mxu0 0.0
    %864 = vmatpush1.msra.mxu0 0.0
    %865 = vmatprep.subr.mxu0 0.0
    %866 = vmatpush1.msra.mxu0 0.0
    %867 = vmatprep.mubr.f32.mxu0 0.0
    %868 = vmatmul.mubr.f32.gmra.mrb[0].mxu0 %v721
    %v869 = vpop.f32.mrb[0].mxu0
    %v870 = vadd.f32 0.0, %v869
    %v871 = vpop.f32.mrb[0].mxu0
    %v872 = vadd.f32 0.0, %v871
    %873 = vmatprep.mubr.f32.mxu0 0.0
    %874 = vmatmul.mubr.f32.gmra.mrb[0].mxu0 %v724
    %v875 = vpop.f32.mrb[0].mxu0
    %v876 = vadd.f32 0.0, %v875
    %v877 = vpop.f32.mrb[0].mxu0
    %v878 = vadd.f32 0.0, %v877
    %879 = vdwg.mxu0
    %880 = vmatprep.subr.mxu0 %v661
    %881 = vmatpush1.msra.mxu0 %v660
    %882 = vmatprep.subr.mxu0 %v669
    %883 = vmatpush1.msra.mxu0 %v668
    %884 = vmatprep.subr.mxu0 %v677
    %885 = vmatpush1.msra.mxu0 %v676
    %886 = vmatprep.subr.mxu0 %v685
    %887 = vmatpush1.msra.mxu0 %v684
    %888 = vmatprep.subr.mxu0 %v693
    %889 = vmatpush1.msra.mxu0 %v692
    %890 = vmatprep.subr.mxu0 %v701
    %891 = vmatpush1.msra.mxu0 %v700
    %892 = vmatprep.subr.mxu0 %v709
    %893 = vmatpush1.msra.mxu0 %v708
    %894 = vmatprep.subr.mxu0 %v717
    %895 = vmatpush1.msra.mxu0 %v716
    %896 = vmatprep.subr.mxu0 0.0
    %897 = vmatpush1.msra.mxu0 0.0
    %898 = vmatprep.subr.mxu0 0.0
    %899 = vmatpush1.msra.mxu0 0.0
    %900 = vmatprep.subr.mxu0 0.0
    %901 = vmatpush1.msra.mxu0 0.0
    %902 = vmatprep.subr.mxu0 0.0
    %903 = vmatpush1.msra.mxu0 0.0
    %904 = vmatprep.subr.mxu0 0.0
    %905 = vmatpush1.msra.mxu0 0.0
    %906 = vmatprep.subr.mxu0 0.0
    %907 = vmatpush1.msra.mxu0 0.0
    %908 = vmatprep.subr.mxu0 0.0
    %909 = vmatpush1.msra.mxu0 0.0
    %910 = vmatprep.subr.mxu0 0.0
    %911 = vmatpush1.msra.mxu0 0.0
    %912 = vmatprep.subr.mxu0 0.0
    %913 = vmatpush1.msra.mxu0 0.0
    %914 = vmatprep.subr.mxu0 0.0
    %915 = vmatpush1.msra.mxu0 0.0
    %916 = vmatprep.subr.mxu0 0.0
    %917 = vmatpush1.msra.mxu0 0.0
    %918 = vmatprep.subr.mxu0 0.0
    %919 = vmatpush1.msra.mxu0 0.0
    %920 = vmatprep.subr.mxu0 0.0
    %921 = vmatpush1.msra.mxu0 0.0
    %922 = vmatprep.subr.mxu0 0.0
    %923 = vmatpush1.msra.mxu0 0.0
    %924 = vmatprep.subr.mxu0 0.0
    %925 = vmatpush1.msra.mxu0 0.0
    %926 = vmatprep.subr.mxu0 0.0
    %927 = vmatpush1.msra.mxu0 0.0
    %928 = vmatprep.subr.mxu0 0.0
    %929 = vmatpush1.msra.mxu0 0.0
    %930 = vmatprep.subr.mxu0 0.0
    %931 = vmatpush1.msra.mxu0 0.0
    %932 = vmatprep.subr.mxu0 0.0
    %933 = vmatpush1.msra.mxu0 0.0
    %934 = vmatprep.subr.mxu0 0.0
    %935 = vmatpush1.msra.mxu0 0.0
    %936 = vmatprep.subr.mxu0 0.0
    %937 = vmatpush1.msra.mxu0 0.0
    %938 = vmatprep.subr.mxu0 0.0
    %939 = vmatpush1.msra.mxu0 0.0
    %940 = vmatprep.subr.mxu0 0.0
    %941 = vmatpush1.msra.mxu0 0.0
    %942 = vmatprep.subr.mxu0 0.0
    %943 = vmatpush1.msra.mxu0 0.0
    %944 = vmatprep.mubr.f32.mxu0 0.0
    %945 = vmatmul.mubr.f32.gmra.mrb[0].mxu0 %v721
    %v946 = vpop.f32.mrb[0].mxu0
    %v947 = vadd.f32 0.0, %v946
    %v948 = vpop.f32.mrb[0].mxu0
    %v949 = vadd.f32 0.0, %v948
    %950 = vmatprep.mubr.f32.mxu0 0.0
    %951 = vmatmul.mubr.f32.gmra.mrb[0].mxu0 %v724
    %v952 = vpop.f32.mrb[0].mxu0
    %v953 = vadd.f32 0.0, %v952
    %v954 = vpop.f32.mrb[0].mxu0
    %v955 = vadd.f32 0.0, %v954
    %956 = vdwg.mxu0
    %957 = vmatprep.subr.mxu0 %v663
    %958 = vmatpush1.msra.mxu0 %v662
    %959 = vmatprep.subr.mxu0 %v671
    %960 = vmatpush1.msra.mxu0 %v670
    %961 = vmatprep.subr.mxu0 %v679
    %962 = vmatpush1.msra.mxu0 %v678
    %963 = vmatprep.subr.mxu0 %v687
    %964 = vmatpush1.msra.mxu0 %v686
    %965 = vmatprep.subr.mxu0 %v695
    %966 = vmatpush1.msra.mxu0 %v694
    %967 = vmatprep.subr.mxu0 %v703
    %968 = vmatpush1.msra.mxu0 %v702
    %969 = vmatprep.subr.mxu0 %v711
    %970 = vmatpush1.msra.mxu0 %v710
    %971 = vmatprep.subr.mxu0 %v719
    %972 = vmatpush1.msra.mxu0 %v718
    %973 = vmatprep.subr.mxu0 0.0
    %974 = vmatpush1.msra.mxu0 0.0
    %975 = vmatprep.subr.mxu0 0.0
    %976 = vmatpush1.msra.mxu0 0.0
    %977 = vmatprep.subr.mxu0 0.0
    %978 = vmatpush1.msra.mxu0 0.0
    %979 = vmatprep.subr.mxu0 0.0
    %980 = vmatpush1.msra.mxu0 0.0
    %981 = vmatprep.subr.mxu0 0.0
    %982 = vmatpush1.msra.mxu0 0.0
    %983 = vmatprep.subr.mxu0 0.0
    %984 = vmatpush1.msra.mxu0 0.0
    %985 = vmatprep.subr.mxu0 0.0
    %986 = vmatpush1.msra.mxu0 0.0
    %987 = vmatprep.subr.mxu0 0.0
    %988 = vmatpush1.msra.mxu0 0.0
    %989 = vmatprep.subr.mxu0 0.0
    %990 = vmatpush1.msra.mxu0 0.0
    %991 = vmatprep.subr.mxu0 0.0
    %992 = vmatpush1.msra.mxu0 0.0
    %993 = vmatprep.subr.mxu0 0.0
    %994 = vmatpush1.msra.mxu0 0.0
    %995 = vmatprep.subr.mxu0 0.0
    %996 = vmatpush1.msra.mxu0 0.0
    %997 = vmatprep.subr.mxu0 0.0
    %998 = vmatpush1.msra.mxu0 0.0
    %999 = vmatprep.subr.mxu0 0.0
    %1000 = vmatpush1.msra.mxu0 0.0
    %1001 = vmatprep.subr.mxu0 0.0
    %1002 = vmatpush1.msra.mxu0 0.0
    %1003 = vmatprep.subr.mxu0 0.0
    %1004 = vmatpush1.msra.mxu0 0.0
    %1005 = vmatprep.subr.mxu0 0.0
    %1006 = vmatpush1.msra.mxu0 0.0
    %1007 = vmatprep.subr.mxu0 0.0
    %1008 = vmatpush1.msra.mxu0 0.0
    %1009 = vmatprep.subr.mxu0 0.0
    %1010 = vmatpush1.msra.mxu0 0.0
    %1011 = vmatprep.subr.mxu0 0.0
    %1012 = vmatpush1.msra.mxu0 0.0
    %1013 = vmatprep.subr.mxu0 0.0
    %1014 = vmatpush1.msra.mxu0 0.0
    %1015 = vmatprep.subr.mxu0 0.0
    %1016 = vmatpush1.msra.mxu0 0.0
    %1017 = vmatprep.subr.mxu0 0.0
    %1018 = vmatpush1.msra.mxu0 0.0
    %1019 = vmatprep.subr.mxu0 0.0
    %1020 = vmatpush1.msra.mxu0 0.0
    %1021 = vmatprep.mubr.f32.mxu0 0.0
    %1022 = vmatmul.mubr.f32.gmra.mrb[0].mxu0 %v721
    %v1023 = vpop.f32.mrb[0].mxu0
    %v1024 = vadd.f32 0.0, %v1023
    %v1025 = vpop.f32.mrb[0].mxu0
    %v1026 = vadd.f32 0.0, %v1025
    %1027 = vmatprep.mubr.f32.mxu0 0.0
    %1028 = vmatmul.mubr.f32.gmra.mrb[0].mxu0 %v724
    %v1029 = vpop.f32.mrb[0].mxu0
    %v1030 = vadd.f32 0.0, %v1029
    %v1031 = vpop.f32.mrb[0].mxu0
    %v1032 = vadd.f32 0.0, %v1031
    %1033 = vdwg.mxu0
    %v1034 = vmul.f32 %v21, %v793
    %v1035 = vmul.f32 %v22, %v795
    %v1036 = vmul.f32 %v23, %v870
    %v1037 = vmul.f32 %v24, %v872
    %v1038 = vmul.f32 %v25, %v947
    %v1039 = vmul.f32 %v26, %v949
    %v1040 = vmul.f32 %v27, %v1024
    %v1041 = vmul.f32 %v28, %v1026
    %v1042 = vmul.f32 %v29, %v799
    %v1043 = vmul.f32 %v30, %v801
    %v1044 = vmul.f32 %v31, %v876
    %v1045 = vmul.f32 %v32, %v878
    %v1046 = vmul.f32 %v33, %v953
    %v1047 = vmul.f32 %v34, %v955
    %v1048 = vmul.f32 %v35, %v1030
    %v1049 = vmul.f32 %v36, %v1032
    %1050 = vst [vmem:[#allocation2] sm:$0xff] %v1034
    %1051 = vst [vmem:[#allocation2 + $0x8] sm:$0xff] %v1035
    %1052 = vst [vmem:[#allocation2 + $0x10] sm:$0xff] %v1036
    %1053 = vst [vmem:[#allocation2 + $0x18] sm:$0xff] %v1037
    %1054 = vst [vmem:[#allocation2 + $0x20] sm:$0xff] %v1038
    %1055 = vst [vmem:[#allocation2 + $0x28] sm:$0xff] %v1039
    %1056 = vst [vmem:[#allocation2 + $0x30] sm:$0xff] %v1040
    %1057 = vst [vmem:[#allocation2 + $0x38] sm:$0xff] %v1041
    %1058 = vst [vmem:[#allocation2 + $0x40] sm:$0xff] %v1042
    %1059 = vst [vmem:[#allocation2 + $0x48] sm:$0xff] %v1043
    %1060 = vst [vmem:[#allocation2 + $0x50] sm:$0xff] %v1044
    %1061 = vst [vmem:[#allocation2 + $0x58] sm:$0xff] %v1045
    %1062 = vst [vmem:[#allocation2 + $0x60] sm:$0xff] %v1046
    %1063 = vst [vmem:[#allocation2 + $0x68] sm:$0xff] %v1047
    %1064 = vst [vmem:[#allocation2 + $0x70] sm:$0xff] %v1048
    %1065 = vst [vmem:[#allocation2 + $0x78] sm:$0xff] %v1049
    // Predicated region
    $region22: #{tpu_custom_call.1} parent=1 // pred_check
      _
    $region23: #{tpu_custom_call.1} parent=1 // pred_check_branch
      %1067 = sbr.rel (0) target = $region25
    $region24: #{tpu_custom_call.1} parent=1 // pred_region
      %s1069 = ssub.s32 2048, 2048
      %1070 = vsyncadd [#allocation3], %s1069
      %s1071 = sshll.u32 [#allocation2], 4
      %s1072 = int_to_ptr.vmem [resolvable:$true] %s1071
      %1077 = dma.vmem_to_hbm [thread:$0]  %s1072, 2048, %s5, [#allocation3], 1024, 1024, 64
    $region25: #{tpu_custom_call.1} parent=1 // pred_fallthru
      _
    // Predicated region
    $region26: #{tpu_custom_call.1} parent=1 // pred_check
      _
    $region27: #{tpu_custom_call.1} parent=1 // pred_check_branch
      %1079 = sbr.rel (0) target = $region29
    $region28: #{tpu_custom_call.1} parent=1 // pred_region
      %1080 = dma.done [#allocation3], 2048
    $region29: #{tpu_custom_call.1} parent=1 // pred_fallthru
      _
    %1081 = vsyncpa [#allocation3], 1

</llo_original>
